<compile_context>
chip_gen: v7x
topology: tpu7x:2x2x1
jax: 0.10.0
libtpu: 0.0.40
codegen_flags: <defaults>
</compile_context>

<pallas_src>
import functools

import jax
import jax.numpy as jnp
from jax.experimental import pallas as pl
from jax.experimental.pallas import tpu as pltpu


# ----------------------------------------------------------------------------
# Pallas kernel: per-layer filter-wise |grad| mean + std-normalized saliency.
# Gradient arrives in its natural (C_out, D) layout; reduce along lanes.
# ----------------------------------------------------------------------------
def _layer_saliency_kernel(g_ref, mean_ref, std_ref, out_ref, *, inv_d, d_total, tf, td):
    # g_ref:    (tf, td) gradient tile, filters on sublanes, flattened (I*H*W) on lanes.
    # mean_ref: (tf, 1)  testset mean of |grad| for this layer's filters.
    # std_ref:  (tf, 1)  testset std  of |grad| for this layer's filters.
    # out_ref:  (tf, 1)  resident accumulator / final saliency (f32).
    k = pl.program_id(1)

    a = jnp.abs(g_ref[...]).astype(jnp.float32)                    # VPU
    if d_total % td != 0:
        # Partial last D-block: out-of-bounds lanes hold unspecified data -> mask.
        lane = jax.lax.broadcasted_iota(jnp.int32, (tf, td), 1)
        a = jnp.where(k * td + lane < d_total, a, 0.0)
    psum = jnp.sum(a, axis=-1, keepdims=True)                      # (tf, 1) XLU lane-reduce

    @pl.when(k == 0)
    def _():
        out_ref[...] = jnp.zeros_like(out_ref)

    out_ref[...] += psum                                           # f32 accumulation

    @pl.when(k == pl.num_programs(1) - 1)
    def _():
        std = std_ref[...]
        std = jnp.where(std <= 1e-14, jnp.ones_like(std), std)     # std[std<=1e-14] = 1
        # mean(|g|) = sum(|g|) * (1/D); (naive - mean) / std, exact divide.
        out_ref[...] = (out_ref[...] * inv_d - mean_ref[...]) / std


def _choose_tiles(c, d):
    """Pick (tf, td): full-extent for small layers, large aligned tiles otherwise.

    512 x 2048 f32 = 4 MiB per gradient tile (8 MiB double-buffered): fits v5e/v6e
    scoped VMEM with the raised limit and stays well under v7x's 64 MiB physical.
    """
    tf = c if c <= 512 else 512       # multiple of 8 when tiled, full dim otherwise
    td = d if d <= 2048 else 2048     # multiple of 128 when tiled, full dim otherwise
    return tf, td


def _layer_filter_saliency(g2d, mean_col, std_col, d_total):
    """One conv layer: (C, D) grad -> (C,) std-normalized filter saliency."""
    c = g2d.shape[0]
    tf, td = _choose_tiles(c, d_total)
    grid = (pl.cdiv(c, tf), pl.cdiv(d_total, td))   # filters parallel, reduction last

    kernel = functools.partial(
        _layer_saliency_kernel, inv_d=1.0 / d_total, d_total=d_total, tf=tf, td=td)

    out = pl.pallas_call(
        kernel,
        out_shape=jax.ShapeDtypeStruct((c, 1), jnp.float32),
        grid_spec=pltpu.PrefetchScalarGridSpec(
            num_scalar_prefetch=0,
            grid=grid,
            in_specs=[
                pl.BlockSpec((tf, td), lambda f, k: (f, k)),   # gradient tiles
                pl.BlockSpec((tf, 1), lambda f, k: (f, 0)),    # mean (tiny)
                pl.BlockSpec((tf, 1), lambda f, k: (f, 0)),    # std (tiny)
            ],
            out_specs=pl.BlockSpec((tf, 1), lambda f, k: (f, 0)),  # resident accumulator
        ),
        compiler_params=pltpu.CompilerParams(
            dimension_semantics=("parallel", "arbitrary"),
            vmem_limit_bytes=48 * 1024 * 1024,
        ),
    )(g2d, mean_col, std_col)

    return out[:, 0]


def filter_saliency(conv_grads, testset_mean_abs_grad, testset_std_abs_grad):
    """All 4-D conv-weight gradients -> concatenated std-normalized saliency."""
    mean_f = testset_mean_abs_grad.astype(jnp.float32)
    std_f = testset_std_abs_grad.astype(jnp.float32)

    pieces = []
    off = 0
    for g in conv_grads:
        c = g.shape[0]
        d = int(g.shape[1] * g.shape[2] * g.shape[3])
        g2d = g.reshape(c, d)                          # contiguous view, no data movement
        mean_col = mean_f[off:off + c].reshape(c, 1)   # static slice, num_filters floats
        std_col = std_f[off:off + c].reshape(c, 1)
        pieces.append(_layer_filter_saliency(g2d, mean_col, std_col, d))
        off += c
    return jnp.concatenate(pieces)                     # tiny (num_filters floats)


# ----------------------------------------------------------------------------
# A small synthetic "net" + criterion (the module wraps an arbitrary net).
# Deterministic init; conv params are the 4-D tensors the saliency aggregates.
# ----------------------------------------------------------------------------
def init_params(key):
    k1, k2, k3 = jax.random.split(key, 3)
    return {
        "conv1_w": 0.1 * jax.random.normal(k1, (8, 3, 3, 3), jnp.float32),    # OIHW
        "conv1_b": jnp.zeros((8,), jnp.float32),
        "conv2_w": 0.1 * jax.random.normal(k2, (16, 8, 3, 3), jnp.float32),   # OIHW
        "conv2_b": jnp.zeros((16,), jnp.float32),
        "fc_w": 0.1 * jax.random.normal(k3, (10, 16), jnp.float32),
        "fc_b": jnp.zeros((10,), jnp.float32),
    }


def net_apply(params, x):  # x: NCHW
    dn = ("NCHW", "OIHW", "NCHW")
    y = jax.lax.conv_general_dilated(x, params["conv1_w"], (1, 1), "SAME",
                                     dimension_numbers=dn)
    y = jax.nn.relu(y + params["conv1_b"][None, :, None, None])
    y = jax.lax.conv_general_dilated(y, params["conv2_w"], (1, 1), "SAME",
                                     dimension_numbers=dn)
    y = jax.nn.relu(y + params["conv2_b"][None, :, None, None])
    y = jnp.mean(y, axis=(2, 3))                       # global average pool -> (N, 16)
    return y @ params["fc_w"].T + params["fc_b"]       # logits (N, 10)


def cross_entropy(logits, targets):
    logp = jax.nn.log_softmax(logits, axis=-1)
    return -jnp.mean(jnp.take_along_axis(logp, targets[:, None], axis=-1))


def loss_fn(params, inputs, targets):
    return cross_entropy(net_apply(params, inputs), targets)


# ----------------------------------------------------------------------------
# SaliencyModel.forward (mode='std', aggregation='filter_wise', signed=False)
# ----------------------------------------------------------------------------
@jax.jit
def saliency_forward(params, inputs, targets, testset_mean_abs_grad, testset_std_abs_grad):
    # TODO(synk): autograd through the wrapped net stays in plain JAX (jax.grad);
    # the conv backward has no hand-written Pallas equivalent here.
    grads = jax.grad(loss_fn)(params, inputs, targets)

    # nn.Module parameter order: conv1.w, conv1.b, conv2.w, conv2.b, fc.w, fc.b;
    # filter_wise aggregation keeps only the 4-D (conv weight) gradients.
    conv_grads = [grads["conv1_w"], grads["conv2_w"]]
    return filter_saliency(conv_grads, testset_mean_abs_grad, testset_std_abs_grad)


# Plain-JAX reference of steps 3-5 (for the correctness check in __main__).
def _reference_saliency(params, inputs, targets, mean_v, std_v):
    grads = jax.grad(loss_fn)(params, inputs, targets)
    pieces = [jnp.mean(jnp.abs(grads["conv1_w"]), axis=(1, 2, 3)),
              jnp.mean(jnp.abs(grads["conv2_w"]), axis=(1, 2, 3))]
    naive = jnp.abs(jnp.concatenate(pieces))
    std = jnp.where(std_v <= 1e-14, jnp.ones_like(std_v), std_v)
    return (naive - mean_v) / std


if __name__ == "__main__":
    key = jax.random.PRNGKey(0)
    k_params, k_x, k_t, k_m, k_s = jax.random.split(key, 5)

    params = init_params(k_params)

    # Small shapes consistent with the module: NCHW image batch + class targets.
    x = jax.random.normal(k_x, (2, 3, 16, 16), jnp.float32)
    targets = jax.random.randint(k_t, (2,), 0, 10)

    num_filters = params["conv1_w"].shape[0] + params["conv2_w"].shape[0]   # 24
    testset_mean_abs_grad = jnp.abs(0.01 * jax.random.normal(k_m, (num_filters,), jnp.float32))
    testset_std_abs_grad = jnp.abs(0.01 * jax.random.normal(k_s, (num_filters,), jnp.float32))
    # exercise the std<=1e-14 clamp on one entry
    testset_std_abs_grad = testset_std_abs_grad.at[3].set(0.0)

    out = saliency_forward(params, x, targets, testset_mean_abs_grad, testset_std_abs_grad)
    out = jax.block_until_ready(out)

    ref = _reference_saliency(params, x, targets, testset_mean_abs_grad, testset_std_abs_grad)
    ref = jax.block_until_ready(ref)

    assert out.shape == (num_filters,) and out.dtype == jnp.float32
    assert bool(jnp.all(jnp.isfinite(out)))
    assert bool(jnp.allclose(out, ref, rtol=1e-5, atol=1e-6))
    print("KERNEL_OK")
</pallas_src>

<mosaic_0001>
module attributes {stable_mosaic.version = 11 : i64} {
  func.func @_layer_saliency_kernel(%arg0: i32, %arg1: i32, %arg2: memref<8x27xf32, #tpu.memory_space<vmem>>, %arg3: memref<8x1xf32, #tpu.memory_space<vmem>>, %arg4: memref<8x1xf32, #tpu.memory_space<vmem>>, %arg5: memref<8x1xf32, #tpu.memory_space<vmem>>) attributes {dimension_semantics = [#tpu.dimension_semantics<parallel>, #tpu.dimension_semantics<arbitrary>], iteration_bounds = array<i64: 1, 1>, scalar_prefetch = 0 : i64, scratch_operands = 0 : i64, tpu.core_type = #tpu.core_type<tc>, window_params = [{transform_indices = @transform_0, window_bounds = array<i64: 8, 27>}, {transform_indices = @transform_1, window_bounds = array<i64: 8, 1>}, {transform_indices = @transform_2, window_bounds = array<i64: 8, 1>}, {transform_indices = @transform_3, window_bounds = array<i64: 8, 1>}]} {
    %c0 = arith.constant 0 : index
    %c0_0 = arith.constant 0 : index
    %0 = vector.load %arg2[%c0, %c0_0] : memref<8x27xf32, #tpu.memory_space<vmem>>, vector<8x27xf32>
    %1 = math.absf %0 : vector<8x27xf32>
    %cst = arith.constant dense<0.000000e+00> : vector<8xf32>
    %2 = vector.multi_reduction <add>, %1, %cst [1] : vector<8x27xf32> to vector<8xf32>
    %3 = vector.shape_cast %2 : vector<8xf32> to vector<8x1xf32>
    %c0_i32 = arith.constant 0 : i32
    %4 = arith.cmpi eq, %arg1, %c0_i32 : i32
    %5 = arith.extui %4 : i1 to i32
    %c0_i32_1 = arith.constant 0 : i32
    %6 = arith.cmpi ne, %5, %c0_i32_1 : i32
    scf.if %6 {
      %cst_8 = arith.constant 0.000000e+00 : f32
      %13 = vector.broadcast %cst_8 : f32 to vector<8x1xf32>
      %c0_9 = arith.constant 0 : index
      %c0_10 = arith.constant 0 : index
      %14 = vector.load %arg5[%c0_9, %c0_10] : memref<8x1xf32, #tpu.memory_space<vmem>>, vector<8x1xf32>
      tpu.vector_store %arg5[%c0_9, %c0_10], %13 {strides = array<i32>} : memref<8x1xf32, #tpu.memory_space<vmem>>, vector<8x1xf32>,
    } else {
    }
    %c0_2 = arith.constant 0 : index
    %c0_3 = arith.constant 0 : index
    %7 = vector.load %arg5[%c0_2, %c0_3] : memref<8x1xf32, #tpu.memory_space<vmem>>, vector<8x1xf32>
    %8 = arith.addf %7, %3 : vector<8x1xf32>
    %c0_4 = arith.constant 0 : index
    %c0_5 = arith.constant 0 : index
    %9 = vector.load %arg5[%c0_4, %c0_5] : memref<8x1xf32, #tpu.memory_space<vmem>>, vector<8x1xf32>
    tpu.vector_store %arg5[%c0_4, %c0_5], %8 {strides = array<i32>} : memref<8x1xf32, #tpu.memory_space<vmem>>, vector<8x1xf32>,
    %c0_i32_6 = arith.constant 0 : i32
    %10 = arith.cmpi eq, %arg1, %c0_i32_6 : i32
    %11 = arith.extui %10 : i1 to i32
    %c0_i32_7 = arith.constant 0 : i32
    %12 = arith.cmpi ne, %11, %c0_i32_7 : i32
    scf.if %12 {
      %c0_8 = arith.constant 0 : index
      %c0_9 = arith.constant 0 : index
      %13 = vector.load %arg4[%c0_8, %c0_9] : memref<8x1xf32, #tpu.memory_space<vmem>>, vector<8x1xf32>
      %cst_10 = arith.constant 9.99999982E-15 : f32
      %14 = vector.broadcast %cst_10 : f32 to vector<8x1xf32>
      %15 = arith.cmpf ole, %13, %14 : vector<8x1xf32>
      %cst_11 = arith.constant 1.000000e+00 : f32
      %16 = vector.broadcast %cst_11 : f32 to vector<8x1xf32>
      %17 = arith.select %15, %16, %13 : vector<8x1xi1>, vector<8x1xf32>
      %c0_12 = arith.constant 0 : index
      %c0_13 = arith.constant 0 : index
      %18 = vector.load %arg5[%c0_12, %c0_13] : memref<8x1xf32, #tpu.memory_space<vmem>>, vector<8x1xf32>
      %cst_14 = arith.constant 0.0370370373 : f32
      %19 = vector.broadcast %cst_14 : f32 to vector<8x1xf32>
      %20 = arith.mulf %18, %19 : vector<8x1xf32>
      %c0_15 = arith.constant 0 : index
      %c0_16 = arith.constant 0 : index
      %21 = vector.load %arg3[%c0_15, %c0_16] : memref<8x1xf32, #tpu.memory_space<vmem>>, vector<8x1xf32>
      %22 = arith.subf %20, %21 : vector<8x1xf32>
      %23 = arith.divf %22, %17 : vector<8x1xf32>
      %c0_17 = arith.constant 0 : index
      %c0_18 = arith.constant 0 : index
      %24 = vector.load %arg5[%c0_17, %c0_18] : memref<8x1xf32, #tpu.memory_space<vmem>>, vector<8x1xf32>
      tpu.vector_store %arg5[%c0_17, %c0_18], %23 {strides = array<i32>} : memref<8x1xf32, #tpu.memory_space<vmem>>, vector<8x1xf32>,
    } else {
    }
    return
  }
  func.func @transform_0(%arg0: i32, %arg1: i32) -> (i32, i32) {
    %c0_i32 = arith.constant 0 : i32
    return %arg0, %arg1 : i32, i32
  }
  func.func @transform_1(%arg0: i32, %arg1: i32) -> (i32, i32) {
    %c0_i32 = arith.constant 0 : i32
    %c0_i32_0 = arith.constant 0 : i32
    return %arg0, %c0_i32 : i32, i32
  }
  func.func @transform_2(%arg0: i32, %arg1: i32) -> (i32, i32) {
    %c0_i32 = arith.constant 0 : i32
    %c0_i32_0 = arith.constant 0 : i32
    return %arg0, %c0_i32 : i32, i32
  }
  func.func @transform_3(%arg0: i32, %arg1: i32) -> (i32, i32) {
    %c0_i32 = arith.constant 0 : i32
    %c0_i32_0 = arith.constant 0 : i32
    return %arg0, %c0_i32 : i32, i32
  }
}

module attributes {stable_mosaic.version = 11 : i64} {
  func.func @_layer_saliency_kernel(%arg0: i32, %arg1: i32, %arg2: memref<16x72xf32, #tpu.memory_space<vmem>>, %arg3: memref<16x1xf32, #tpu.memory_space<vmem>>, %arg4: memref<16x1xf32, #tpu.memory_space<vmem>>, %arg5: memref<16x1xf32, #tpu.memory_space<vmem>>) attributes {dimension_semantics = [#tpu.dimension_semantics<parallel>, #tpu.dimension_semantics<arbitrary>], iteration_bounds = array<i64: 1, 1>, scalar_prefetch = 0 : i64, scratch_operands = 0 : i64, tpu.core_type = #tpu.core_type<tc>, window_params = [{transform_indices = @transform_0, window_bounds = array<i64: 16, 72>}, {transform_indices = @transform_1, window_bounds = array<i64: 16, 1>}, {transform_indices = @transform_2, window_bounds = array<i64: 16, 1>}, {transform_indices = @transform_3, window_bounds = array<i64: 16, 1>}]} {
    %c0 = arith.constant 0 : index
    %c0_0 = arith.constant 0 : index
    %0 = vector.load %arg2[%c0, %c0_0] : memref<16x72xf32, #tpu.memory_space<vmem>>, vector<16x72xf32>
    %1 = math.absf %0 : vector<16x72xf32>
    %cst = arith.constant dense<0.000000e+00> : vector<16xf32>
    %2 = vector.multi_reduction <add>, %1, %cst [1] : vector<16x72xf32> to vector<16xf32>
    %3 = vector.shape_cast %2 : vector<16xf32> to vector<16x1xf32>
    %c0_i32 = arith.constant 0 : i32
    %4 = arith.cmpi eq, %arg1, %c0_i32 : i32
    %5 = arith.extui %4 : i1 to i32
    %c0_i32_1 = arith.constant 0 : i32
    %6 = arith.cmpi ne, %5, %c0_i32_1 : i32
    scf.if %6 {
      %cst_8 = arith.constant 0.000000e+00 : f32
      %13 = vector.broadcast %cst_8 : f32 to vector<16x1xf32>
      %c0_9 = arith.constant 0 : index
      %c0_10 = arith.constant 0 : index
      %14 = vector.load %arg5[%c0_9, %c0_10] : memref<16x1xf32, #tpu.memory_space<vmem>>, vector<16x1xf32>
      tpu.vector_store %arg5[%c0_9, %c0_10], %13 {strides = array<i32>} : memref<16x1xf32, #tpu.memory_space<vmem>>, vector<16x1xf32>,
    } else {
    }
    %c0_2 = arith.constant 0 : index
    %c0_3 = arith.constant 0 : index
    %7 = vector.load %arg5[%c0_2, %c0_3] : memref<16x1xf32, #tpu.memory_space<vmem>>, vector<16x1xf32>
    %8 = arith.addf %7, %3 : vector<16x1xf32>
    %c0_4 = arith.constant 0 : index
    %c0_5 = arith.constant 0 : index
    %9 = vector.load %arg5[%c0_4, %c0_5] : memref<16x1xf32, #tpu.memory_space<vmem>>, vector<16x1xf32>
    tpu.vector_store %arg5[%c0_4, %c0_5], %8 {strides = array<i32>} : memref<16x1xf32, #tpu.memory_space<vmem>>, vector<16x1xf32>,
    %c0_i32_6 = arith.constant 0 : i32
    %10 = arith.cmpi eq, %arg1, %c0_i32_6 : i32
    %11 = arith.extui %10 : i1 to i32
    %c0_i32_7 = arith.constant 0 : i32
    %12 = arith.cmpi ne, %11, %c0_i32_7 : i32
    scf.if %12 {
      %c0_8 = arith.constant 0 : index
      %c0_9 = arith.constant 0 : index
      %13 = vector.load %arg4[%c0_8, %c0_9] : memref<16x1xf32, #tpu.memory_space<vmem>>, vector<16x1xf32>
      %cst_10 = arith.constant 9.99999982E-15 : f32
      %14 = vector.broadcast %cst_10 : f32 to vector<16x1xf32>
      %15 = arith.cmpf ole, %13, %14 : vector<16x1xf32>
      %cst_11 = arith.constant 1.000000e+00 : f32
      %16 = vector.broadcast %cst_11 : f32 to vector<16x1xf32>
      %17 = arith.select %15, %16, %13 : vector<16x1xi1>, vector<16x1xf32>
      %c0_12 = arith.constant 0 : index
      %c0_13 = arith.constant 0 : index
      %18 = vector.load %arg5[%c0_12, %c0_13] : memref<16x1xf32, #tpu.memory_space<vmem>>, vector<16x1xf32>
      %cst_14 = arith.constant 0.013888889 : f32
      %19 = vector.broadcast %cst_14 : f32 to vector<16x1xf32>
      %20 = arith.mulf %18, %19 : vector<16x1xf32>
      %c0_15 = arith.constant 0 : index
      %c0_16 = arith.constant 0 : index
      %21 = vector.load %arg3[%c0_15, %c0_16] : memref<16x1xf32, #tpu.memory_space<vmem>>, vector<16x1xf32>
      %22 = arith.subf %20, %21 : vector<16x1xf32>
      %23 = arith.divf %22, %17 : vector<16x1xf32>
      %c0_17 = arith.constant 0 : index
      %c0_18 = arith.constant 0 : index
      %24 = vector.load %arg5[%c0_17, %c0_18] : memref<16x1xf32, #tpu.memory_space<vmem>>, vector<16x1xf32>
      tpu.vector_store %arg5[%c0_17, %c0_18], %23 {strides = array<i32>} : memref<16x1xf32, #tpu.memory_space<vmem>>, vector<16x1xf32>,
    } else {
    }
    return
  }
  func.func @transform_0(%arg0: i32, %arg1: i32) -> (i32, i32) {
    %c0_i32 = arith.constant 0 : i32
    return %arg0, %arg1 : i32, i32
  }
  func.func @transform_1(%arg0: i32, %arg1: i32) -> (i32, i32) {
    %c0_i32 = arith.constant 0 : i32
    %c0_i32_0 = arith.constant 0 : i32
    return %arg0, %c0_i32 : i32, i32
  }
  func.func @transform_2(%arg0: i32, %arg1: i32) -> (i32, i32) {
    %c0_i32 = arith.constant 0 : i32
    %c0_i32_0 = arith.constant 0 : i32
    return %arg0, %c0_i32 : i32, i32
  }
  func.func @transform_3(%arg0: i32, %arg1: i32) -> (i32, i32) {
    %c0_i32 = arith.constant 0 : i32
    %c0_i32_0 = arith.constant 0 : i32
    return %arg0, %c0_i32 : i32, i32
  }
}

</mosaic_0001>

<llo_original>
// kernel: saliency_forward.2
$region0: #{saliency_forward.2}
  #allocation0 [shape = 'u32[]', space=smem, size = 0x4, offset = 0x4, fixed_abs, tag = 'smem constant byte address 0x4 - core index']
  #allocation1 [shape = 'u32[144,128]{1,0:T(1,128)}', space=vmem, size = 0x12000, scoped, tag = 'internal scratch']
  %s0 = inlined_call_operand.vmem [shape: f32[8,27], index: 0, kind: input, shape index: {}]
  %s1 = inlined_call_operand.vmem [shape: f32[8,1], index: 1, kind: input, shape index: {}]
  %s2 = inlined_call_operand.vmem [shape: f32[8,1], index: 2, kind: input, shape index: {}]
  %s3 = inlined_call_operand.vmem [shape: f32[8,1], index: 3, kind: output, shape index: {}]
  %s4 = sld [smem:[#allocation0]]
  $region30: #{saliency_forward.2} parent=0
    _
  %s6 = ssub.s32 1, %s4
  %s7 = scalar_select 0, %s6, %s4
  // Predicated region
  $region2: #{saliency_forward.2} parent=0 // pred_check
    _
  $region3: #{saliency_forward.2} parent=0 // pred_check_branch
    %9 = sbr.rel (0) target = $region5
  $region4: #{saliency_forward.2} parent=0 // pred_region
    _
  $region5: #{saliency_forward.2} parent=0 // pred_fallthru
    _
  // Predicated region
  $region6: #{saliency_forward.2} parent=0 // pred_check
    _
  $region7: #{saliency_forward.2} parent=0 // pred_check_branch
    %11 = sbr.rel (0) target = $region9
  $region8: #{saliency_forward.2} parent=0 // pred_region
    _
  $region9: #{saliency_forward.2} parent=0 // pred_fallthru
    _
  // Predicated region
  $region10: #{saliency_forward.2} parent=0 // pred_check
    _
  $region11: #{saliency_forward.2} parent=0 // pred_check_branch
    %13 = sbr.rel (0) target = $region13
  $region12: #{saliency_forward.2} parent=0 // pred_region
    _
  $region13: #{saliency_forward.2} parent=0 // pred_fallthru
    _
  %v14 = vld [vmem:[%s0] sm:$0xff]
  %v15 = vand.u32 2147483647, %v14
  %vm16 = vcmask 220160
  %v17 = vsel %vm16, %v15, 0.0
  %18 = vadd.xlane.f32.xlu0 %v17
  %v19 = vpop.xlane.xlu0 %18
  %p20 = scmp.eq.s32.totalorder 0, 0
  // Predicated region
  $region14: #{saliency_forward.2} parent=0 // pred_check
    %p21 = pneg %p20
  $region15: #{saliency_forward.2} parent=0 // pred_check_branch
    %23 = sbr.rel (%p21) target = $region17
  $region16: #{saliency_forward.2} parent=0 // pred_region
    %vm24 = vcmask 7168
    %25 = vst.msk [vmem:[%s3] sm:$0xff] %vm24, 0.0
  $region17: #{saliency_forward.2} parent=0 // pred_fallthru
    _
  %v26 = vld [vmem:[%s3] sm:$0xff]
  %v27 = vadd.f32 %v26, %v19
  %vm28 = vcmask 7168
  %29 = vst.msk [vmem:[%s3] sm:$0xff] %vm28, %v27
  // Predicated region
  $region18: #{saliency_forward.2} parent=0 // pred_check
    %p30 = pneg %p20
  $region19: #{saliency_forward.2} parent=0 // pred_check_branch
    %32 = sbr.rel (%p30) target = $region21
  $region20: #{saliency_forward.2} parent=0 // pred_region
    %v33 = vld [vmem:[%s2] sm:$0xff]
    %vm34 = vcmp.le.f32.partialorder %v33, 1e-14
    %v35 = vsel %vm34, 1.0, %v33
    %v36 = vld [vmem:[%s3] sm:$0xff]
    %v37 = vmul.f32 %v36, 0.037037037
    %v38 = vld [vmem:[%s1] sm:$0xff]
    %v39 = vsub.f32 %v37, %v38
    %v40 = vrcp.pop %v35
    %v41 = vmul.f32 %v39, %v40
    %42 = vst.msk [vmem:[%s3] sm:$0xff] %vm28, %v41
  $region21: #{saliency_forward.2} parent=0 // pred_fallthru
    _
  // Predicated region
  $region22: #{saliency_forward.2} parent=0 // pred_check
    _
  $region23: #{saliency_forward.2} parent=0 // pred_check_branch
    %44 = sbr.rel (0) target = $region25
  $region24: #{saliency_forward.2} parent=0 // pred_region
    _
  $region25: #{saliency_forward.2} parent=0 // pred_fallthru
    _
  // Predicated region
  $region26: #{saliency_forward.2} parent=0 // pred_check
    _
  $region27: #{saliency_forward.2} parent=0 // pred_check_branch
    %46 = sbr.rel (0) target = $region29
  $region28: #{saliency_forward.2} parent=0 // pred_region
    _
  $region29: #{saliency_forward.2} parent=0 // pred_fallthru
    _

// kernel: saliency_forward.3
$region0: #{saliency_forward.3}
  #allocation0 [shape = 'u32[]', space=smem, size = 0x4, offset = 0x4, fixed_abs, tag = 'smem constant byte address 0x4 - core index']
  #allocation1 [shape = 'u32[144,128]{1,0:T(1,128)}', space=vmem, size = 0x12000, scoped, tag = 'internal scratch']
  %s0 = inlined_call_operand.vmem [shape: f32[16,72], index: 0, kind: input, shape index: {}]
  %s1 = inlined_call_operand.vmem [shape: f32[16,1], index: 1, kind: input, shape index: {}]
  %s2 = inlined_call_operand.vmem [shape: f32[16,1], index: 2, kind: input, shape index: {}]
  %s3 = inlined_call_operand.vmem [shape: f32[16,1], index: 3, kind: output, shape index: {}]
  %s4 = sld [smem:[#allocation0]]
  $region30: #{saliency_forward.3} parent=0
    _
  %s6 = ssub.s32 1, %s4
  %s7 = scalar_select 0, %s6, %s4
  // Predicated region
  $region2: #{saliency_forward.3} parent=0 // pred_check
    _
  $region3: #{saliency_forward.3} parent=0 // pred_check_branch
    %9 = sbr.rel (0) target = $region5
  $region4: #{saliency_forward.3} parent=0 // pred_region
    _
  $region5: #{saliency_forward.3} parent=0 // pred_fallthru
    _
  // Predicated region
  $region6: #{saliency_forward.3} parent=0 // pred_check
    _
  $region7: #{saliency_forward.3} parent=0 // pred_check_branch
    %11 = sbr.rel (0) target = $region9
  $region8: #{saliency_forward.3} parent=0 // pred_region
    _
  $region9: #{saliency_forward.3} parent=0 // pred_fallthru
    _
  // Predicated region
  $region10: #{saliency_forward.3} parent=0 // pred_check
    _
  $region11: #{saliency_forward.3} parent=0 // pred_check_branch
    %13 = sbr.rel (0) target = $region13
  $region12: #{saliency_forward.3} parent=0 // pred_region
    _
  $region13: #{saliency_forward.3} parent=0 // pred_fallthru
    _
  %v14 = vld [vmem:[%s0] sm:$0xff]
  %v15 = vld [vmem:[%s0 + $0x8] sm:$0xff]
  %v16 = vand.u32 2147483647, %v14
  %v17 = vand.u32 2147483647, %v15
  %vm18 = vcmask 588800
  %v19 = vsel %vm18, %v16, 0.0
  %20 = vadd.xlane.f32.xlu0 %v19
  %v21 = vpop.xlane.xlu0 %20
  %v22 = vsel %vm18, %v17, 0.0
  %23 = vadd.xlane.f32.xlu0 %v22
  %v24 = vpop.xlane.xlu0 %23
  %p25 = scmp.eq.s32.totalorder 0, 0
  // Predicated region
  $region14: #{saliency_forward.3} parent=0 // pred_check
    %p26 = pneg %p25
  $region15: #{saliency_forward.3} parent=0 // pred_check_branch
    %28 = sbr.rel (%p26) target = $region17
  $region16: #{saliency_forward.3} parent=0 // pred_region
    %vm29 = vcmask 7168
    %30 = vst.msk [vmem:[%s3] sm:$0xff] %vm29, 0.0
    %31 = vst.msk [vmem:[%s3 + $0x8] sm:$0xff] %vm29, 0.0
  $region17: #{saliency_forward.3} parent=0 // pred_fallthru
    _
  %v32 = vld [vmem:[%s3] sm:$0xff]
  %v33 = vld [vmem:[%s3 + $0x8] sm:$0xff]
  %v34 = vadd.f32 %v32, %v21
  %v35 = vadd.f32 %v33, %v24
  %vm36 = vcmask 7168
  %37 = vst.msk [vmem:[%s3] sm:$0xff] %vm36, %v34
  %38 = vst.msk [vmem:[%s3 + $0x8] sm:$0xff] %vm36, %v35
  // Predicated region
  $region18: #{saliency_forward.3} parent=0 // pred_check
    %p39 = pneg %p25
  $region19: #{saliency_forward.3} parent=0 // pred_check_branch
    %41 = sbr.rel (%p39) target = $region21
  $region20: #{saliency_forward.3} parent=0 // pred_region
    %v42 = vld [vmem:[%s2] sm:$0xff]
    %v43 = vld [vmem:[%s2 + $0x8] sm:$0xff]
    %vm44 = vcmp.le.f32.partialorder %v42, 1e-14
    %vm45 = vcmp.le.f32.partialorder %v43, 1e-14
    %v46 = vsel %vm44, 1.0, %v42
    %v47 = vsel %vm45, 1.0, %v43
    %v48 = vld [vmem:[%s3] sm:$0xff]
    %v49 = vld [vmem:[%s3 + $0x8] sm:$0xff]
    %v50 = vmul.f32 %v48, 0.013888889
    %v51 = vmul.f32 %v49, 0.013888889
    %v52 = vld [vmem:[%s1] sm:$0xff]
    %v53 = vld [vmem:[%s1 + $0x8] sm:$0xff]
    %v54 = vsub.f32 %v50, %v52
    %v55 = vsub.f32 %v51, %v53
    %v56 = vrcp.pop %v46
    %v57 = vmul.f32 %v54, %v56
    %v58 = vrcp.pop %v47
    %v59 = vmul.f32 %v55, %v58
    %60 = vst.msk [vmem:[%s3] sm:$0xff] %vm36, %v57
    %61 = vst.msk [vmem:[%s3 + $0x8] sm:$0xff] %vm36, %v59
  $region21: #{saliency_forward.3} parent=0 // pred_fallthru
    _
  // Predicated region
  $region22: #{saliency_forward.3} parent=0 // pred_check
    _
  $region23: #{saliency_forward.3} parent=0 // pred_check_branch
    %63 = sbr.rel (0) target = $region25
  $region24: #{saliency_forward.3} parent=0 // pred_region
    _
  $region25: #{saliency_forward.3} parent=0 // pred_fallthru
    _
  // Predicated region
  $region26: #{saliency_forward.3} parent=0 // pred_check
    _
  $region27: #{saliency_forward.3} parent=0 // pred_check_branch
    %65 = sbr.rel (0) target = $region29
  $region28: #{saliency_forward.3} parent=0 // pred_region
    _
  $region29: #{saliency_forward.3} parent=0 // pred_fallthru
    _

</llo_original>
